<compile_context>
chip_gen: v5e
topology: v5e:2x2
jax: 0.10.0
libtpu: 0.0.40
codegen_flags: <defaults>
</compile_context>

<pallas_src>
import jax
import jax.numpy as jnp
from jax.experimental import pallas as pl
from jax.experimental.pallas import tpu as pltpu


def _round_up(x, m):
    return ((x + m - 1) // m) * m


def channel_attention(x, w1, w2, *, target_tile_bytes=8 * 1024 * 1024):
    """x: (B, C, H, W); w1: (C//16, C); w2: (C, C//16)  ->  (B, C, 1, 1)."""
    B, C, H, W = x.shape
    Cr = w1.shape[0]
    HW = H * W
    itemsize = x.dtype.itemsize

    # ---------------- batch tiling ----------------
    # Bt divides B exactly (no padding / no over-cover on batch).  Prefer >= 2
    # batch grid steps when B >= 2 so the "parallel" axis feeds both v7x TCs.
    if B >= 2:
        Bt = max(d for d in range(1, min(B, 8) + 1) if B % d == 0 and B // d >= 2)
    else:
        Bt = 1  # single batch row: only one TC gets work on v7x
    n_b = B // Bt

    # ---------------- spatial tiling ----------------
    # THW is a multiple of 128 sized from the *input* dtype so one streamed
    # tile is ~target_tile_bytes.  The grid over-covers HW (cdiv); the ragged
    # last tile is masked in-kernel (no jnp.pad copy of x in HBM).
    target_tile_bytes = min(int(target_tile_bytes), 16 * 1024 * 1024)
    bytes_per_lane = max(1, Bt * C * itemsize)
    max_lanes = max(128, (target_tile_bytes // bytes_per_lane) // 128 * 128)
    MAX_LANES = 256 * 128  # bounds the unrolled in-register lane-group combine
    THW = min(_round_up(HW, 128), max_lanes, MAX_LANES)
    n_hw = pl.cdiv(HW, THW)
    n_lane = THW // 128
    need_mask = (n_hw * THW) != HW
    inv_hw = 1.0 / HW

    x2 = x.reshape(B, C, HW)          # contiguous reshape: no HBM copy
    w1t = jnp.transpose(w1)           # (C, Cr)  row-form matmul operands
    w2t = jnp.transpose(w2)           # (Cr, C)

    tile_bytes = Bt * C * THW * itemsize
    vmem_limit = int(min(48 * 1024 * 1024,
                         max(32 * 1024 * 1024, 2 * tile_bytes + 8 * 1024 * 1024)))

    def kernel(x_ref, w1t_ref, w2t_ref, out_ref, acc_sum, acc_max):
        k = pl.program_id(1)

        @pl.when(k == 0)
        def _init():
            acc_sum[...] = jnp.zeros_like(acc_sum)
            acc_max[...] = jnp.full_like(acc_max, -jnp.inf)

        def accumulate(masked):
            # Combine the THW/128 lane groups of this tile in registers (pure
            # VPU); scratch is read/written once per step, not per vreg.
            if masked:
                lane = jax.lax.broadcasted_iota(jnp.int32, (1, 1, 128), 2)
                base = k * THW
            ps = None
            pm = None
            for t in range(n_lane):
                sl = x_ref[:, :, t * 128:(t + 1) * 128].astype(jnp.float32)
                if masked:
                    valid = (base + t * 128 + lane) < HW
                    sl_s = jnp.where(valid, sl, 0.0)
                    sl_m = jnp.where(valid, sl, -jnp.inf)
                else:
                    sl_s = sl
                    sl_m = sl
                ps = sl_s if ps is None else ps + sl_s
                pm = sl_m if pm is None else jnp.maximum(pm, sl_m)
            acc_sum[...] = acc_sum[...] + ps
            acc_max[...] = jnp.maximum(acc_max[...], pm)

        if not need_mask:
            accumulate(False)
        else:
            if n_hw > 1:
                @pl.when(k < n_hw - 1)
                def _steady():
                    accumulate(False)

            @pl.when(k == n_hw - 1)
            def _last_tile():
                accumulate(True)

        @pl.when(k == n_hw - 1)
        def _finalize():
            # Single deferred cross-lane reduce (XLU) per batch tile.
            avg = jnp.sum(acc_sum[...], axis=-1) * inv_hw    # (Bt, C)
            mx = jnp.max(acc_max[...], axis=-1)              # (Bt, C)
            pooled = jnp.concatenate([avg, mx], axis=0)      # (2*Bt, C)

            w1t_v = w1t_ref[...].astype(jnp.float32)         # (C, Cr)
            w2t_v = w2t_ref[...].astype(jnp.float32)         # (Cr, C)

            # Fused MLP for both pooled operands.  NOTE: no ReLU — the PyTorch
            # forward never applies self.relu1.
            h = jnp.dot(pooled, w1t_v, preferred_element_type=jnp.float32)  # (2*Bt, Cr)
            o = jnp.dot(h, w2t_v, preferred_element_type=jnp.float32)       # (2*Bt, C)

            gate = jax.nn.sigmoid(o[:Bt] + o[Bt:])           # (Bt, C)
            out_ref[...] = gate.astype(out_ref.dtype)

    cost = pl.CostEstimate(
        flops=int(2 * B * C * HW + 8 * B * C * Cr),
        transcendentals=int(B * C),
        bytes_accessed=int(B * C * HW * itemsize
                           + 2 * C * Cr * w1.dtype.itemsize
                           + B * C * itemsize),
    )

    out = pl.pallas_call(
        kernel,
        out_shape=jax.ShapeDtypeStruct((n_b, Bt, C), x.dtype),
        grid_spec=pltpu.PrefetchScalarGridSpec(
            num_scalar_prefetch=0,
            grid=(n_b, n_hw),                       # reduction (HW) axis last
            in_specs=[
                pl.BlockSpec((Bt, C, THW), lambda b, k: (b, 0, k)),
                pl.BlockSpec((C, Cr), lambda b, k: (0, 0)),
                pl.BlockSpec((Cr, C), lambda b, k: (0, 0)),
            ],
            out_specs=pl.BlockSpec((None, Bt, C), lambda b, k: (b, 0, 0)),
            scratch_shapes=[
                pltpu.VMEM((Bt, C, 128), jnp.float32),   # partial sums
                pltpu.VMEM((Bt, C, 128), jnp.float32),   # running max
            ],
        ),
        compiler_params=pltpu.CompilerParams(
            dimension_semantics=("parallel", "arbitrary"),
            vmem_limit_bytes=vmem_limit,
        ),
        cost_estimate=cost,
    )(x2, w1t, w2t)

    return out.reshape(B, C, 1, 1)


def channel_attention_ref(x, w1, w2):
    # Pure-JAX reference replicating the PyTorch forward (no ReLU in forward).
    avg = jnp.mean(x, axis=(2, 3))                 # (B, C)
    mx = jnp.max(x, axis=(2, 3))                   # (B, C)

    def mlp(v):                                    # v: (B, C)
        return (v @ w1.T) @ w2.T                   # (B, Cr) -> (B, C)

    out = jax.nn.sigmoid(mlp(avg) + mlp(mx))
    return out[:, :, None, None]


if __name__ == "__main__":
    # fc1 hardcodes in_planes // 16 (ignores `ratio`), so C must be >= 16.
    key = jax.random.PRNGKey(0)
    kx, k1, k2 = jax.random.split(key, 3)

    B, C = 2, 32
    Cr = C // 16
    w1 = jax.random.uniform(k1, (Cr, C), dtype=jnp.float32,
                            minval=-1.0, maxval=1.0) * (1.0 / jnp.sqrt(C))
    w2 = jax.random.uniform(k2, (C, Cr), dtype=jnp.float32,
                            minval=-1.0, maxval=1.0) * (1.0 / jnp.sqrt(Cr))

    # ---- check 1: single-tile path (HW = 256 divides 128 evenly, no mask) ----
    H, W = 16, 16
    x = jax.random.normal(kx, (B, C, H, W), dtype=jnp.float32)
    out = jax.block_until_ready(channel_attention(x, w1, w2))
    ref = jax.block_until_ready(channel_attention_ref(x, w1, w2))
    assert out.shape == (B, C, 1, 1), out.shape
    assert jnp.allclose(out, ref, atol=1e-5, rtol=1e-5), "mismatch (single tile)"

    # ---- check 2: multi-tile HW with ragged last tile (400 -> 4 x 128) ----
    x_b = jax.random.normal(jax.random.PRNGKey(7), (B, C, 20, 20), dtype=jnp.float32)
    out_b = jax.block_until_ready(
        channel_attention(x_b, w1, w2, target_tile_bytes=16 * 1024))
    ref_b = jax.block_until_ready(channel_attention_ref(x_b, w1, w2))
    assert jnp.allclose(out_b, ref_b, atol=1e-5, rtol=1e-5), "mismatch (tiled/masked)"

    # ---- check 3: batch blocking (B=4 -> Bt=2) + HW < 128 (over-covered, masked) ----
    x_c = jax.random.normal(jax.random.PRNGKey(11), (4, C, 9, 9), dtype=jnp.float32)
    out_c = jax.block_until_ready(channel_attention(x_c, w1, w2))
    ref_c = jax.block_until_ready(channel_attention_ref(x_c, w1, w2))
    assert out_c.shape == (4, C, 1, 1), out_c.shape
    assert jnp.allclose(out_c, ref_c, atol=1e-5, rtol=1e-5), "mismatch (batch blocks)"

    print("KERNEL_OK")
</pallas_src>

<mosaic_0001>
module attributes {stable_mosaic.version = 11 : i64} {
  func.func @kernel(%arg0: i32, %arg1: i32, %arg2: memref<1x32x256xf32, #tpu.memory_space<vmem>>, %arg3: memref<32x2xf32, #tpu.memory_space<vmem>>, %arg4: memref<2x32xf32, #tpu.memory_space<vmem>>, %arg5: memref<1x1x32xf32, #tpu.memory_space<vmem>>, %arg6: memref<1x32x128xf32, #tpu.memory_space<vmem>>, %arg7: memref<1x32x128xf32, #tpu.memory_space<vmem>>) attributes {dimension_semantics = [#tpu.dimension_semantics<parallel>, #tpu.dimension_semantics<arbitrary>], iteration_bounds = array<i64: 2, 1>, scalar_prefetch = 0 : i64, scratch_operands = 2 : i64, tpu.core_type = #tpu.core_type<tc>, window_params = [{transform_indices = @transform_0, window_bounds = array<i64: 1, 32, 256>}, {pipeline_mode = #tpu.pipeline_mode<synchronous>, transform_indices = @transform_1, window_bounds = array<i64: 32, 2>}, {pipeline_mode = #tpu.pipeline_mode<synchronous>, transform_indices = @transform_2, window_bounds = array<i64: 2, 32>}, {transform_indices = @transform_3, window_bounds = array<i64: 1, 1, 32>}]} {
    %c0_i32 = arith.constant 0 : i32
    %0 = arith.cmpi eq, %arg1, %c0_i32 : i32
    %1 = arith.extui %0 : i1 to i32
    %c0_i32_0 = arith.constant 0 : i32
    %2 = arith.cmpi ne, %1, %c0_i32_0 : i32
    scf.if %2 {
      %cst = arith.constant 0.000000e+00 : f32
      %16 = vector.broadcast %cst : f32 to vector<1x32x128xf32>
      %c0_19 = arith.constant 0 : index
      %c0_20 = arith.constant 0 : index
      %c0_21 = arith.constant 0 : index
      %17 = vector.load %arg6[%c0_19, %c0_20, %c0_21] : memref<1x32x128xf32, #tpu.memory_space<vmem>>, vector<1x32x128xf32>
      tpu.vector_store %arg6[%c0_19, %c0_20, %c0_21], %16 {strides = array<i32>} : memref<1x32x128xf32, #tpu.memory_space<vmem>>, vector<1x32x128xf32>,
      %cst_22 = arith.constant 0xFF800000 : f32
      %18 = vector.broadcast %cst_22 : f32 to vector<1x32x128xf32>
      %c0_23 = arith.constant 0 : index
      %c0_24 = arith.constant 0 : index
      %c0_25 = arith.constant 0 : index
      %19 = vector.load %arg7[%c0_23, %c0_24, %c0_25] : memref<1x32x128xf32, #tpu.memory_space<vmem>>, vector<1x32x128xf32>
      tpu.vector_store %arg7[%c0_23, %c0_24, %c0_25], %18 {strides = array<i32>} : memref<1x32x128xf32, #tpu.memory_space<vmem>>, vector<1x32x128xf32>,
    } else {
    }
    %c0 = arith.constant 0 : index
    %c0_1 = arith.constant 0 : index
    %c0_2 = arith.constant 0 : index
    %3 = vector.load %arg2[%c0, %c0_1, %c0_2] : memref<1x32x256xf32, #tpu.memory_space<vmem>>, vector<1x32x128xf32>
    %c0_3 = arith.constant 0 : index
    %c0_4 = arith.constant 0 : index
    %c128 = arith.constant 128 : index
    %4 = vector.load %arg2[%c0_3, %c0_4, %c128] : memref<1x32x256xf32, #tpu.memory_space<vmem>>, vector<1x32x128xf32>
    %5 = arith.addf %3, %4 : vector<1x32x128xf32>
    %6 = arith.maximumf %3, %4 : vector<1x32x128xf32>
    %c0_5 = arith.constant 0 : index
    %c0_6 = arith.constant 0 : index
    %c0_7 = arith.constant 0 : index
    %7 = vector.load %arg6[%c0_5, %c0_6, %c0_7] : memref<1x32x128xf32, #tpu.memory_space<vmem>>, vector<1x32x128xf32>
    %8 = arith.addf %7, %5 : vector<1x32x128xf32>
    %c0_8 = arith.constant 0 : index
    %c0_9 = arith.constant 0 : index
    %c0_10 = arith.constant 0 : index
    %9 = vector.load %arg6[%c0_8, %c0_9, %c0_10] : memref<1x32x128xf32, #tpu.memory_space<vmem>>, vector<1x32x128xf32>
    tpu.vector_store %arg6[%c0_8, %c0_9, %c0_10], %8 {strides = array<i32>} : memref<1x32x128xf32, #tpu.memory_space<vmem>>, vector<1x32x128xf32>,
    %c0_11 = arith.constant 0 : index
    %c0_12 = arith.constant 0 : index
    %c0_13 = arith.constant 0 : index
    %10 = vector.load %arg7[%c0_11, %c0_12, %c0_13] : memref<1x32x128xf32, #tpu.memory_space<vmem>>, vector<1x32x128xf32>
    %11 = arith.maximumf %10, %6 : vector<1x32x128xf32>
    %c0_14 = arith.constant 0 : index
    %c0_15 = arith.constant 0 : index
    %c0_16 = arith.constant 0 : index
    %12 = vector.load %arg7[%c0_14, %c0_15, %c0_16] : memref<1x32x128xf32, #tpu.memory_space<vmem>>, vector<1x32x128xf32>
    tpu.vector_store %arg7[%c0_14, %c0_15, %c0_16], %11 {strides = array<i32>} : memref<1x32x128xf32, #tpu.memory_space<vmem>>, vector<1x32x128xf32>,
    %c0_i32_17 = arith.constant 0 : i32
    %13 = arith.cmpi eq, %arg1, %c0_i32_17 : i32
    %14 = arith.extui %13 : i1 to i32
    %c0_i32_18 = arith.constant 0 : i32
    %15 = arith.cmpi ne, %14, %c0_i32_18 : i32
    scf.if %15 {
      %c0_19 = arith.constant 0 : index
      %c0_20 = arith.constant 0 : index
      %c0_21 = arith.constant 0 : index
      %16 = vector.load %arg6[%c0_19, %c0_20, %c0_21] : memref<1x32x128xf32, #tpu.memory_space<vmem>>, vector<1x32x128xf32>
      %cst = arith.constant dense<0.000000e+00> : vector<1x32xf32>
      %17 = vector.multi_reduction <add>, %16, %cst [2] : vector<1x32x128xf32> to vector<1x32xf32>
      %cst_22 = arith.constant 3.906250e-03 : f32
      %18 = vector.broadcast %cst_22 : f32 to vector<1x32xf32>
      %19 = arith.mulf %17, %18 : vector<1x32xf32>
      %c0_23 = arith.constant 0 : index
      %c0_24 = arith.constant 0 : index
      %c0_25 = arith.constant 0 : index
      %20 = vector.load %arg7[%c0_23, %c0_24, %c0_25] : memref<1x32x128xf32, #tpu.memory_space<vmem>>, vector<1x32x128xf32>
      %cst_26 = arith.constant dense<0xFF800000> : vector<1x32xf32>
      %21 = vector.multi_reduction <maximumf>, %20, %cst_26 [2] : vector<1x32x128xf32> to vector<1x32xf32>
      %22 = tpu.concatenate %19, %21 in 0 : vector<1x32xf32>, vector<1x32xf32> -> vector<2x32xf32>
      %c0_27 = arith.constant 0 : index
      %c0_28 = arith.constant 0 : index
      %23 = vector.load %arg3[%c0_27, %c0_28] : memref<32x2xf32, #tpu.memory_space<vmem>>, vector<32x2xf32>
      %c0_29 = arith.constant 0 : index
      %c0_30 = arith.constant 0 : index
      %24 = vector.load %arg4[%c0_29, %c0_30] : memref<2x32xf32, #tpu.memory_space<vmem>>, vector<2x32xf32>
      %cst_31 = arith.constant dense<0.000000e+00> : vector<2x2xf32>
      %25 = tpu.matmul %22, %23, %cst_31 {dimension_numbers = #tpu.dot_dimension_numbers<[1], [0], [0], [1], [0, 0, 1, 1], [], []>} : vector<2x32xf32>, vector<32x2xf32>, vector<2x2xf32> -> vector<2x2xf32>
      %cst_32 = arith.constant dense<0.000000e+00> : vector<2x32xf32>
      %26 = tpu.matmul %25, %24, %cst_32 {dimension_numbers = #tpu.dot_dimension_numbers<[1], [0], [0], [1], [0, 0, 1, 1], [], []>} : vector<2x2xf32>, vector<2x32xf32>, vector<2x32xf32> -> vector<2x32xf32>
      %27 = vector.extract_strided_slice %26 {offsets = [0, 0], sizes = [1, 32], strides = [1, 1]} : vector<2x32xf32> to vector<1x32xf32>
      %28 = vector.extract_strided_slice %26 {offsets = [1, 0], sizes = [1, 32], strides = [1, 1]} : vector<2x32xf32> to vector<1x32xf32>
      %29 = arith.addf %27, %28 : vector<1x32xf32>
      %30 = arith.negf %29 : vector<1x32xf32>
      %31 = math.exp %30 : vector<1x32xf32>
      %cst_33 = arith.constant 1.000000e+00 : f32
      %32 = vector.broadcast %cst_33 : f32 to vector<1x32xf32>
      %33 = arith.addf %32, %31 : vector<1x32xf32>
      %34 = arith.divf %32, %33 : vector<1x32xf32>
      %c0_34 = arith.constant 0 : index
      %c0_35 = arith.constant 0 : index
      %c0_36 = arith.constant 0 : index
      %35 = vector.load %arg5[%c0_34, %c0_35, %c0_36] : memref<1x1x32xf32, #tpu.memory_space<vmem>>, vector<1x1x32xf32>
      %36 = vector.shape_cast %35 : vector<1x1x32xf32> to vector<1x32xf32>
      %37 = vector.shape_cast %34 : vector<1x32xf32> to vector<1x1x32xf32>
      tpu.vector_store %arg5[%c0_34, %c0_35, %c0_36], %37 {strides = array<i32>} : memref<1x1x32xf32, #tpu.memory_space<vmem>>, vector<1x1x32xf32>,
    } else {
    }
    return
  }
  func.func @transform_0(%arg0: i32, %arg1: i32) -> (i32, i32, i32) {
    %c0_i32 = arith.constant 0 : i32
    %c0_i32_0 = arith.constant 0 : i32
    return %arg0, %c0_i32, %arg1 : i32, i32, i32
  }
  func.func @transform_1(%arg0: i32, %arg1: i32) -> (i32, i32) {
    %c0_i32 = arith.constant 0 : i32
    %c0_i32_0 = arith.constant 0 : i32
    %c0_i32_1 = arith.constant 0 : i32
    return %c0_i32, %c0_i32_0 : i32, i32
  }
  func.func @transform_2(%arg0: i32, %arg1: i32) -> (i32, i32) {
    %c0_i32 = arith.constant 0 : i32
    %c0_i32_0 = arith.constant 0 : i32
    %c0_i32_1 = arith.constant 0 : i32
    return %c0_i32, %c0_i32_0 : i32, i32
  }
  func.func @transform_3(%arg0: i32, %arg1: i32) -> (i32, i32, i32) {
    %c0_i32 = arith.constant 0 : i32
    %c0_i32_0 = arith.constant 0 : i32
    %c0_i32_1 = arith.constant 0 : i32
    return %arg0, %c0_i32, %c0_i32_0 : i32, i32, i32
  }
}

</mosaic_0001>

<llo_original>
// kernel: tpu_custom_call.1
$region0: #{tpu_custom_call.1}
  #allocation0 [shape = 'u32[]', space=smem, size = 0x4, offset = 0x4, fixed_abs, tag = 'smem constant byte address 0x4 - core index']
  #allocation1 [shape = 'u32[72,128]{1,0:T(1,128)}', space=vmem, size = 0x9000, scoped, tag = 'internal scratch']
  #allocation2 [shape = 'f32[1,32,128]{2,1,0:T(8,128)}', space=vmem, size = 0x4000, scoped, tag = 'scratch operand']
  #allocation3 [shape = 'f32[1,32,128]{2,1,0:T(8,128)}', space=vmem, size = 0x4000, scoped, tag = 'scratch operand']
  %s0 = inlined_call_operand.hbm [shape: f32[2,32,256], index: 0, kind: input, shape index: {}]
  %s1 = inlined_call_operand.vmem [shape: f32[32,2], index: 1, kind: input, shape index: {}]
  %s2 = inlined_call_operand.vmem [shape: f32[2,32], index: 2, kind: input, shape index: {}]
  %s3 = inlined_call_operand.hbm [shape: f32[2,1,32], index: 3, kind: output, shape index: {}]
  %s4 = sld [smem:[#allocation0]]
  $region57: #{tpu_custom_call.1} parent=0
    _
  %s6 = ssub.s32 1, %s4
  %s7 = scalar_select 0, %s6, %s4
  $region1: #{tpu_custom_call.1} parent=0
    #allocation4 [shape = 'u8[65536]{0}', space=vmem, size = 0x10000, scoped, tag = 'input window, operand 0']
    #allocation5 [shape = 's32[2]{0}', space=sflag, size = 0x8, scoped, tag = 'scoped memory for tpu_custom_call.1']
    #allocation6 [shape = 's32[2]{0}', space=sflag, size = 0x8, scoped, tag = 'scoped memory for tpu_custom_call.1']
    #allocation7 [shape = 'u8[1024]{0}', space=vmem, size = 0x400, scoped, tag = 'output window, operand 0']
    %8 = vsyncpa [#allocation5], 0
    %s9 = scalar_lea.sflag [#allocation5], 1
    %10 = vsyncpa %s9, 0
    %11 = vsyncpa [#allocation6], 0
    %s12 = scalar_lea.sflag [#allocation6], 1
    %13 = vsyncpa %s12, 0
    loop: start=0, step=1, limit=4
    $region2: #{tpu_custom_call.1} parent=1 // loop_pre_header
      _
    $region3: #{tpu_custom_call.1} parent=1 // loop_header
      %s15 = sphi 0, %s19
      %p16 = scmp.ge.s32.totalorder %s15, 4
      %s22 = sphi 0, %s34
      %s23 = sphi 0, %s30
      %s24 = sphi 0, %s22
      %s25 = sphi 0, %s23
      %s26 = sphi 0, %s24
      %s27 = sphi 0, %s25
      %s39 = sphi 0, %s41
      %s42 = sphi 0, %s39
      %s43 = sphi 0, %s42
      %s59 = sphi 0, %s43
      %s63 = sphi 0, %s63
      %s65 = sphi 0, %s63
      %s66 = sphi 0, %s65
      %s80 = sphi 0, %s66
      %s84 = sphi 0, %s84
      %s86 = sphi 0, %s84
      %s87 = sphi 0, %s86
      %s101 = sphi 0, %s87
      %s107 = sphi 0, %s109
      %s110 = sphi 0, %s107
      %s111 = sphi 0, %s110
      %s127 = sphi 0, %s111
    $region4: #{tpu_custom_call.1} parent=1 // loop_header_branch
      %18 = sbr.rel (%p16) target = $region8
    $region5: #{tpu_custom_call.1} parent=1 // loop_body
      %s20 = ssub.s32 %s15, 1
      %s21 = ssub.s32 %s15, 2
      %s28 = sadd.s32 1, %s23
      %p29 = scmp.ge.s32.totalorder %s28, 1
      %s30 = scalar_select %p29, 0, %s28
      %s31 = sadd.s32 1, %s22
      %s32 = scalar_select %p29, %s31, %s22
      %p33 = scmp.ge.s32.totalorder %s32, 2
      %s34 = scalar_select %p33, 0, %s32
      %s35 = ssub.s32 %s22, %s34
      %s36 = ssub.s32 %s23, %s30
      %s37 = sor.u32 %s35, %s36
      %p38 = scmp.eq.s32.totalorder %s37, 0
      %s40 = sadd.s32 %s39, 1
      %s41 = scalar_select %p38, %s39, %s40
      %p44 = pneg %p38
      %p45 = scmp.eq.s32.totalorder %s15, 1
      %p46 = por %p44, %p45
      %p47 = scmp.ne.s32.totalorder %s39, %s42
      %p48 = scmp.eq.s32.totalorder %s15, 0
      %p49 = por %p47, %p48
      %p50 = scmp.ne.s32.totalorder %s39, %s42
      %p51 = scmp.eq.s32.totalorder %s20, 1
      %p52 = por %p50, %p51
      %p53 = scmp.ne.s32.totalorder %s42, %s43
      %p54 = scmp.eq.s32.totalorder %s20, 0
      %p55 = por %p53, %p54
      %p56 = scmp.ne.s32.totalorder %s42, %s43
      %p57 = scmp.eq.s32.totalorder %s21, 1
      %p58 = por %p56, %p57
      %p60 = scmp.ne.s32.totalorder %s43, %s59
      %p61 = scmp.eq.s32.totalorder %s21, 0
      %p62 = por %p60, %p61
      %s64 = sadd.s32 %s63, 1
      %p67 = scmp.eq.s32.totalorder %s15, 1
      %p68 = scmp.ne.s32.totalorder %s63, %s65
      %p69 = scmp.eq.s32.totalorder %s15, 0
      %p70 = por %p68, %p69
      %p71 = scmp.ne.s32.totalorder %s63, %s65
      %p72 = scmp.eq.s32.totalorder %s20, 1
      %p73 = por %p71, %p72
      %p74 = scmp.ne.s32.totalorder %s65, %s66
      %p75 = scmp.eq.s32.totalorder %s20, 0
      %p76 = por %p74, %p75
      %p77 = scmp.ne.s32.totalorder %s65, %s66
      %p78 = scmp.eq.s32.totalorder %s21, 1
      %p79 = por %p77, %p78
      %p81 = scmp.ne.s32.totalorder %s66, %s80
      %p82 = scmp.eq.s32.totalorder %s21, 0
      %p83 = por %p81, %p82
      %s85 = sadd.s32 %s84, 1
      %p88 = scmp.eq.s32.totalorder %s15, 1
      %p89 = scmp.ne.s32.totalorder %s84, %s86
      %p90 = scmp.eq.s32.totalorder %s15, 0
      %p91 = por %p89, %p90
      %p92 = scmp.ne.s32.totalorder %s84, %s86
      %p93 = scmp.eq.s32.totalorder %s20, 1
      %p94 = por %p92, %p93
      %p95 = scmp.ne.s32.totalorder %s86, %s87
      %p96 = scmp.eq.s32.totalorder %s20, 0
      %p97 = por %p95, %p96
      %p98 = scmp.ne.s32.totalorder %s86, %s87
      %p99 = scmp.eq.s32.totalorder %s21, 1
      %p100 = por %p98, %p99
      %p102 = scmp.ne.s32.totalorder %s87, %s101
      %p103 = scmp.eq.s32.totalorder %s21, 0
      %p104 = por %p102, %p103
      %s105 = ssub.s32 %s22, %s34
      %p106 = scmp.eq.s32.totalorder %s105, 0
      %s108 = sadd.s32 %s107, 1
      %s109 = scalar_select %p106, %s107, %s108
      %p112 = pneg %p106
      %p113 = scmp.eq.s32.totalorder %s15, 1
      %p114 = por %p112, %p113
      %p115 = scmp.ne.s32.totalorder %s107, %s110
      %p116 = scmp.eq.s32.totalorder %s15, 0
      %p117 = por %p115, %p116
      %p118 = scmp.ne.s32.totalorder %s107, %s110
      %p119 = scmp.eq.s32.totalorder %s20, 1
      %p120 = por %p118, %p119
      %p121 = scmp.ne.s32.totalorder %s110, %s111
      %p122 = scmp.eq.s32.totalorder %s20, 0
      %p123 = por %p121, %p122
      %p124 = scmp.ne.s32.totalorder %s110, %s111
      %p125 = scmp.eq.s32.totalorder %s21, 1
      %p126 = por %p124, %p125
      %p128 = scmp.ne.s32.totalorder %s111, %s127
      %p129 = scmp.eq.s32.totalorder %s21, 0
      %p130 = por %p128, %p129
      %p131 = scmp.le.s32.totalorder 1, %s15
      %p132 = scmp.lt.s32.totalorder %s15, 3
      %p133 = pnand %p131, %p132
      %p134 = pneg %p133
      // Predicated region
      $region9: #{tpu_custom_call.1} parent=5 // pred_check
        _
      $region10: #{tpu_custom_call.1} parent=5 // pred_check_branch
        %136 = sbr.rel (%p133) target = $region12
      $region11: #{tpu_custom_call.1} parent=5 // pred_region
        %s137 = ssub.s32 %s15, 1
        // Predicated region
        $region13: #{tpu_custom_call.1} parent=11 // pred_check
          %p138 = pneg %p76
        $region14: #{tpu_custom_call.1} parent=11 // pred_check_branch
          %140 = sbr.rel (%p138) target = $region16
        $region15: #{tpu_custom_call.1} parent=11 // pred_region
          _
        $region16: #{tpu_custom_call.1} parent=11 // pred_fallthru
          _
        // Predicated region
        $region17: #{tpu_custom_call.1} parent=11 // pred_check
          %p141 = pneg %p97
        $region18: #{tpu_custom_call.1} parent=11 // pred_check_branch
          %143 = sbr.rel (%p141) target = $region20
        $region19: #{tpu_custom_call.1} parent=11 // pred_region
          _
        $region20: #{tpu_custom_call.1} parent=11 // pred_fallthru
          _
      $region12: #{tpu_custom_call.1} parent=5 // pred_fallthru
        _
      %p144 = scmp.lt.s32.totalorder %s15, 2
      // Predicated region
      $region21: #{tpu_custom_call.1} parent=5 // pred_check
        %p145 = pneg %p144
      $region22: #{tpu_custom_call.1} parent=5 // pred_check_branch
        %147 = sbr.rel (%p145) target = $region24
      $region23: #{tpu_custom_call.1} parent=5 // pred_region
        // Predicated region
        $region25: #{tpu_custom_call.1} parent=23 // pred_check
          %p148 = pneg %p49
        $region26: #{tpu_custom_call.1} parent=23 // pred_check_branch
          %150 = sbr.rel (%p148) target = $region28
        $region27: #{tpu_custom_call.1} parent=23 // pred_region
          %s151 = sand.u32 %s39, 1
          %s152 = scalar_lea.sflag [#allocation5], %s151
          %s153 = sand.u32 %s39, 1
          %s154 = smul.addr %s153, 64
          %s155 = scalar_lea.vmem [#allocation4], %s154
          %s156 = smul.u32 2, %s23
          %158 = vsyncadd %s152, 0
          %s159 = smul.addr %s22, 8
          %s160 = sadd.s32 %s156, %s159
          %s161 = smul.addr %s160, 8
          %s162 = scalar_lea.hbm %s0, %s161
          %s163 = sshll.u32 %s162, 4
          %s164 = int_to_ptr.hbm [resolvable:$true] %s163
          %s165 = sshll.u32 %s155, 4
          %s166 = int_to_ptr.vmem [resolvable:$true] %s165
          %171 = dma.hbm_to_vmem [thread:$0]  %s164, 1024, %s166, %s152, 256, 256, 16
        $region28: #{tpu_custom_call.1} parent=23 // pred_fallthru
          _
      $region24: #{tpu_custom_call.1} parent=5 // pred_fallthru
        _
      %p172 = scmp.le.s32.totalorder 1, %s15
      %p173 = scmp.lt.s32.totalorder %s15, 3
      %p174 = pnand %p172, %p173
      %p175 = pneg %p174
      // Predicated region
      $region29: #{tpu_custom_call.1} parent=5 // pred_check
        _
      $region30: #{tpu_custom_call.1} parent=5 // pred_check_branch
        %177 = sbr.rel (%p174) target = $region32
      $region31: #{tpu_custom_call.1} parent=5 // pred_region
        %s178 = ssub.s32 %s15, 1
        %s179 = sand.u32 %s42, 1
        %s180 = scalar_lea.sflag [#allocation5], %s179
        %s181 = sand.u32 %s42, 1
        %s182 = smul.addr %s181, 64
        %s183 = scalar_lea.vmem [#allocation4], %s182
        // Predicated region
        $region33: #{tpu_custom_call.1} parent=31 // pred_check
          %p184 = pneg %p55
        $region34: #{tpu_custom_call.1} parent=31 // pred_check_branch
          %186 = sbr.rel (%p184) target = $region36
        $region35: #{tpu_custom_call.1} parent=31 // pred_region
          %188 = dma.done %s180, 1024
        $region36: #{tpu_custom_call.1} parent=31 // pred_fallthru
          _
        %s189 = sand.u32 %s42, 1
        %s190 = scalar_lea.sflag [#allocation5], %s189
        %s191 = sand.u32 %s42, 1
        %s192 = smul.addr %s191, 64
        %s193 = scalar_lea.vmem [#allocation4], %s192
        %p194 = pneg %p55
        %p195 = pneg %p52
        %p196 = pneg %p76
        %p197 = pneg %p73
        %p198 = pneg %p97
        %p199 = pneg %p94
        %p200 = pneg %p123
        %p201 = pneg %p120
        %s202 = sand.u32 %s110, 1
        %s203 = scalar_lea.sflag [#allocation6], %s202
        %s204 = sand.u32 %s110, 1
        %s205 = scalar_lea.vmem [#allocation7], %s204
        %s206 = smul.u32 2, %s25
        %p207 = scmp.eq.s32.totalorder %s25, 0
        // Predicated region
        $region37: #{tpu_custom_call.1} parent=31 // pred_check
          %p208 = pneg %p207
        $region38: #{tpu_custom_call.1} parent=31 // pred_check_branch
          %210 = sbr.rel (%p208) target = $region40
        $region39: #{tpu_custom_call.1} parent=31 // pred_region
          %211 = vst [vmem:[#allocation2] sm:$0xff] 0.0
          %212 = vst [vmem:[#allocation2 + $0x8] sm:$0xff] 0.0
          %213 = vst [vmem:[#allocation2 + $0x10] sm:$0xff] 0.0
          %214 = vst [vmem:[#allocation2 + $0x18] sm:$0xff] 0.0
          %215 = vst [vmem:[#allocation3] sm:$0xff] -inf
          %216 = vst [vmem:[#allocation3 + $0x8] sm:$0xff] -inf
          %217 = vst [vmem:[#allocation3 + $0x10] sm:$0xff] -inf
          %218 = vst [vmem:[#allocation3 + $0x18] sm:$0xff] -inf
        $region40: #{tpu_custom_call.1} parent=31 // pred_fallthru
          _
        %v219 = vld [vmem:[%s183] sm:$0xff]
        %v220 = vld [vmem:[%s183 + $0x10] sm:$0xff]
        %v221 = vld [vmem:[%s183 + $0x20] sm:$0xff]
        %v222 = vld [vmem:[%s183 + $0x30] sm:$0xff]
        %v223 = vld [vmem:[%s183 + $0x8] sm:$0xff]
        %v224 = vld [vmem:[%s183 + $0x18] sm:$0xff]
        %v225 = vld [vmem:[%s183 + $0x28] sm:$0xff]
        %v226 = vld [vmem:[%s183 + $0x38] sm:$0xff]
        %v227 = vadd.f32 %v219, %v223
        %v228 = vadd.f32 %v220, %v224
        %v229 = vadd.f32 %v221, %v225
        %v230 = vadd.f32 %v222, %v226
        %v231 = vmax.f32 %v219, %v223
        %v232 = vmax.f32 %v220, %v224
        %v233 = vmax.f32 %v221, %v225
        %v234 = vmax.f32 %v222, %v226
        %v235 = vld [vmem:[#allocation2] sm:$0xff]
        %v236 = vld [vmem:[#allocation2 + $0x8] sm:$0xff]
        %v237 = vld [vmem:[#allocation2 + $0x10] sm:$0xff]
        %v238 = vld [vmem:[#allocation2 + $0x18] sm:$0xff]
        %v239 = vadd.f32 %v235, %v227
        %v240 = vadd.f32 %v236, %v228
        %v241 = vadd.f32 %v237, %v229
        %v242 = vadd.f32 %v238, %v230
        %243 = vst [vmem:[#allocation2] sm:$0xff] %v239
        %244 = vst [vmem:[#allocation2 + $0x8] sm:$0xff] %v240
        %245 = vst [vmem:[#allocation2 + $0x10] sm:$0xff] %v241
        %246 = vst [vmem:[#allocation2 + $0x18] sm:$0xff] %v242
        %v247 = vld [vmem:[#allocation3] sm:$0xff]
        %v248 = vld [vmem:[#allocation3 + $0x8] sm:$0xff]
        %v249 = vld [vmem:[#allocation3 + $0x10] sm:$0xff]
        %v250 = vld [vmem:[#allocation3 + $0x18] sm:$0xff]
        %v251 = vmax.f32 %v247, %v231
        %v252 = vmax.f32 %v248, %v232
        %v253 = vmax.f32 %v249, %v233
        %v254 = vmax.f32 %v250, %v234
        %255 = vst [vmem:[#allocation3] sm:$0xff] %v251
        %256 = vst [vmem:[#allocation3 + $0x8] sm:$0xff] %v252
        %257 = vst [vmem:[#allocation3 + $0x10] sm:$0xff] %v253
        %258 = vst [vmem:[#allocation3 + $0x18] sm:$0xff] %v254
        // Predicated region
        $region41: #{tpu_custom_call.1} parent=31 // pred_check
          %p259 = pneg %p207
        $region42: #{tpu_custom_call.1} parent=31 // pred_check_branch
          %261 = sbr.rel (%p259) target = $region44
        $region43: #{tpu_custom_call.1} parent=31 // pred_region
          %v262 = vld [vmem:[#allocation2] sm:$0xff]
          %v263 = vld [vmem:[#allocation2 + $0x8] sm:$0xff]
          %v264 = vld [vmem:[#allocation2 + $0x10] sm:$0xff]
          %v265 = vld [vmem:[#allocation2 + $0x18] sm:$0xff]
          %266 = vadd.xlane.f32.xlu0 %v262
          %v267 = vpop.xlane.xlu0 %266
          %268 = vadd.xlane.f32.xlu0 %v263
          %v269 = vpop.xlane.xlu0 %268
          %270 = vadd.xlane.f32.xlu0 %v264
          %v271 = vpop.xlane.xlu0 %270
          %272 = vadd.xlane.f32.xlu0 %v265
          %v273 = vpop.xlane.xlu0 %272
          %v274 = vmul.f32 %v267, 0.00390625
          %v275 = vmul.f32 %v269, 0.00390625
          %v276 = vmul.f32 %v271, 0.00390625
          %v277 = vmul.f32 %v273, 0.00390625
          %v278 = vld [vmem:[#allocation3] sm:$0xff]
          %v279 = vld [vmem:[#allocation3 + $0x8] sm:$0xff]
          %v280 = vld [vmem:[#allocation3 + $0x10] sm:$0xff]
          %v281 = vld [vmem:[#allocation3 + $0x18] sm:$0xff]
          %282 = vmax.xlane.f32.xlu0 %v278
          %v283 = vpop.xlane.xlu0 %282
          %284 = vmax.xlane.f32.xlu0 %v279
          %v285 = vpop.xlane.xlu0 %284
          %286 = vmax.xlane.f32.xlu0 %v280
          %v287 = vpop.xlane.xlu0 %286
          %288 = vmax.xlane.f32.xlu0 %v281
          %v289 = vpop.xlane.xlu0 %288
          %v294 = vlaneseq
          %v295 = vand.u32 %v294, 127
          %v296 = vperm.slane %v274, %v295
          %v297 = vadd.s32 %v295, 4294967288
          %v298 = vperm.slane %v275, %v297
          %vm299 = vcmask 130112
          %v300 = vsel %vm299, %v298, %v296
          %v301 = vadd.s32 %v295, 4294967280
          %v302 = vperm.slane %v276, %v301
          %vm303 = vcmask 195712
          %v304 = vsel %vm303, %v302, %v300
          %v305 = vadd.s32 %v295, 4294967272
          %v306 = vperm.slane %v277, %v305
          %vm307 = vcmask 261312
          %v308 = vsel %vm307, %v306, %v304
          %v314 = vperm.slane %v283, %v295
          %v315 = vperm.slane %v285, %v297
          %v316 = vsel %vm299, %v315, %v314
          %v317 = vperm.slane %v287, %v301
          %v318 = vsel %vm303, %v317, %v316
          %v319 = vperm.slane %v289, %v305
          %v320 = vsel %vm307, %v319, %v318
          %vm322 = vcmask 1040384
          %v323 = vsel %vm322, %v308, %v320
          %v324 = vld [vmem:[%s1] sm:$0xff]
          %v325 = vld [vmem:[%s1 + $0x8] sm:$0xff]
          %v326 = vld [vmem:[%s1 + $0x10] sm:$0xff]
          %v327 = vld [vmem:[%s1 + $0x18] sm:$0xff]
          %v328 = vld [vmem:[%s2] sm:$0x3]
          %vm329 = vcmask 261120
          %v331 = vsel %vm329, %v323, 0
          %333 = vmatpush.msra.mxu0 0.0
          %334 = vmatpush.msra.mxu0 0.0
          %335 = vmatpush.msra.mxu0 0.0
          %336 = vmatpush.msra.mxu0 0.0
          %337 = vmatpush.msra.mxu0 0.0
          %338 = vmatpush.msra.mxu0 0.0
          %339 = vmatpush.msra.mxu0 0.0
          %340 = vmatpush.msra.mxu0 0.0
          %341 = vmatpush.msra.mxu0 0.0
          %342 = vmatpush.msra.mxu0 0.0
          %343 = vmatpush.msra.mxu0 0.0
          %344 = vmatpush.msra.mxu0 0.0
          %345 = vmatpush.msra.mxu0 %v327
          %346 = vmatpush.msra.mxu0 %v326
          %347 = vmatpush.msra.mxu0 %v325
          %348 = vmatpush.msra.mxu0 %v324
          %349 = vmatmul.f32.gmra.mxu0 %v331
          %v350 = vpop.f32.mrf.mxu0
          %v351 = vadd.f32 0.0, %v350
          %352 = vdwg.mxu0
          %vm353 = vcmask 15360
          %v355 = vsel %vm353, %v351, 0
          %vm357 = vcmask 1041408
          %v359 = vsel %vm357, %v328, 0
          %361 = vmatpush.msra.mxu0 0.0
          %362 = vmatpush.msra.mxu0 0.0
          %363 = vmatpush.msra.mxu0 0.0
          %364 = vmatpush.msra.mxu0 0.0
          %365 = vmatpush.msra.mxu0 0.0
          %366 = vmatpush.msra.mxu0 0.0
          %367 = vmatpush.msra.mxu0 0.0
          %368 = vmatpush.msra.mxu0 0.0
          %369 = vmatpush.msra.mxu0 0.0
          %370 = vmatpush.msra.mxu0 0.0
          %371 = vmatpush.msra.mxu0 0.0
          %372 = vmatpush.msra.mxu0 0.0
          %373 = vmatpush.msra.mxu0 0.0
          %374 = vmatpush.msra.mxu0 0.0
          %375 = vmatpush.msra.mxu0 0.0
          %376 = vmatpush.msra.mxu0 %v359
          %377 = vmatmul.f32.gmra.mxu0 %v355
          %v378 = vpop.f32.mrf.mxu0
          %v379 = vadd.f32 0.0, %v378
          %380 = vdwg.mxu0
          %v382 = vrot.slane %v379, 1
          %v384 = vadd.f32 %v379, %v382
          %v385 = vxor.u32 %v384, 2147483648
          %v386 = vmul.f32 %v385, 1.442695
          %v387 = vpow.pop %v386
          %v388 = vadd.f32 %v387, 1.0
          %v389 = vrcp.pop %v388
          %v390 = vmul.f32 %v388, %v389
          %v391 = vsub.f32 1.0, %v390
          %v392 = vmul.f32 %v389, %v391
          %v393 = vadd.f32 %v389, %v392
          %vm394 = vweird.f32 %v388
          %vm395 = vweird.f32 %v389
          %vm396 = vmor %vm394, %vm395
          %v397 = vsel %vm396, %v389, %v393
          %v398 = vand.u32 2147483647, %v388
          %vm399 = vcmp.eq.f32.partialorder %v398, 8.507059e+37
          %v400 = vand.u32 %v388, 2147483648
          %v401 = vor.u32 1.1754944e-38, %v400
          %v402 = vsel %vm399, %v401, %v397
          %v403 = vmul.f32 1.0, %v402
          %vm404 = vcmask 253952
          %405 = vst.msk [vmem:[%s205] sm:$0x1] %vm404, %v403
        $region44: #{tpu_custom_call.1} parent=31 // pred_fallthru
          _
        %s406 = sand.u32 %s110, 1
        %s407 = scalar_lea.sflag [#allocation6], %s406
        %s408 = sand.u32 %s110, 1
        %s409 = scalar_lea.vmem [#allocation7], %s408
        // Predicated region
        $region45: #{tpu_custom_call.1} parent=31 // pred_check
          %p410 = pneg %p120
        $region46: #{tpu_custom_call.1} parent=31 // pred_check_branch
          %412 = sbr.rel (%p410) target = $region48
        $region47: #{tpu_custom_call.1} parent=31 // pred_region
          %414 = vsyncadd %s407, 0
          %s415 = scalar_lea.hbm %s3, %s24
          %s417 = sshll.u32 %s409, 4
          %s418 = int_to_ptr.vmem [resolvable:$true] %s417
          %s419 = sshll.u32 %s415, 4
          %s420 = int_to_ptr.hbm [resolvable:$true] %s419
          %422 = dma.vmem_to_hbm [thread:$0]  %s418, 16, %s420, %s407
        $region48: #{tpu_custom_call.1} parent=31 // pred_fallthru
          _
      $region32: #{tpu_custom_call.1} parent=5 // pred_fallthru
        _
      %p423 = scmp.le.s32.totalorder 2, %s15
      // Predicated region
      $region49: #{tpu_custom_call.1} parent=5 // pred_check
        %p424 = pneg %p423
      $region50: #{tpu_custom_call.1} parent=5 // pred_check_branch
        %426 = sbr.rel (%p424) target = $region52
      $region51: #{tpu_custom_call.1} parent=5 // pred_region
        %s427 = ssub.s32 %s15, 2
        // Predicated region
        $region53: #{tpu_custom_call.1} parent=51 // pred_check
          %p428 = pneg %p126
        $region54: #{tpu_custom_call.1} parent=51 // pred_check_branch
          %430 = sbr.rel (%p428) target = $region56
        $region55: #{tpu_custom_call.1} parent=51 // pred_region
          %s431 = sand.u32 %s111, 1
          %s432 = scalar_lea.sflag [#allocation6], %s431
          %s433 = sand.u32 %s111, 1
          %s434 = scalar_lea.vmem [#allocation7], %s433
          %436 = dma.done %s432, 16
        $region56: #{tpu_custom_call.1} parent=51 // pred_fallthru
          _
      $region52: #{tpu_custom_call.1} parent=5 // pred_fallthru
        _
    $region6: #{tpu_custom_call.1} parent=1 // loop_footer
      %s19 = sadd.s32 1, %s15
    $region7: #{tpu_custom_call.1} parent=1 // loop_footer_branch
      %14 = sbr.rel target = $region3
    $region8: #{tpu_custom_call.1} parent=1 // loop_exit
      _
    %437 = vsyncpa [#allocation5], 1
    %s438 = scalar_lea.sflag [#allocation5], 1
    %439 = vsyncpa %s438, 1
    %440 = vsyncpa [#allocation6], 1
    %s441 = scalar_lea.sflag [#allocation6], 1
    %442 = vsyncpa %s441, 1

</llo_original>
